<compile_context>
chip_gen: v7x
topology: tpu7x:2x2x1
jax: 0.10.0
libtpu: 0.0.40
codegen_flags: <defaults>
</compile_context>

<pallas_src>
import math

import jax
import jax.numpy as jnp
from jax.experimental import pallas as pl
from jax.experimental.pallas import tpu as pltpu

_LANE = 128
_SUBLANE_32 = 8
_TARGET_TILE_BYTES = 6 * 1024 * 1024     # per x/out tile; x4 (in+out, double-buffered) ≈ 24 MiB
_VMEM_LIMIT_BYTES = 32 * 1024 * 1024     # safe scoped limit on v5e / v6e / v7x
_MIN_PALLAS_BYTES = 1 << 20              # below this, let XLA fuse the add (PPO hot path)


def _bcast_add_kernel(x_ref, b_ref, o_ref):
    # Bias block is (1, tile_c) (broadcast over sublanes) or (tile_r, 1) (broadcast
    # over lanes); jnp broadcasting handles both.  The cast implements PyTorch-style
    # dtype promotion (e.g. bf16 x + f32 bias -> f32 output).
    o_ref[...] = x_ref[...].astype(o_ref.dtype) + b_ref[...]


def _sublane(itemsize):
    # Native packed sublane multiple: 8 rows for 4-byte, 16 for 2-byte, 32 for 1-byte.
    return max(_SUBLANE_32, 32 // max(1, int(itemsize)))


def _choose_tiles(rows, cols, itemsize, sub):
    """(tile_r, tile_c): (sub,128)-aligned, ~_TARGET_TILE_BYTES, full-width rows when
    they fit, and >= 2 total blocks when splittable (v7x has 2 TensorCores)."""
    budget = _TARGET_TILE_BYTES
    if cols <= _LANE or cols * itemsize * sub <= budget:
        tile_c = cols                                       # full width: contiguous DMA spans
    else:
        tile_c = max(_LANE, (budget // (sub * itemsize)) // _LANE * _LANE)
    if rows <= sub:
        tile_r = rows
    else:
        max_r = max(sub, budget // max(1, tile_c * itemsize))
        tile_r = max(sub, (min(rows, max_r) // sub) * sub)
    if pl.cdiv(rows, tile_r) * pl.cdiv(cols, tile_c) < 2:
        if rows >= 2 * sub:
            tile_r = min(tile_r, max(sub, ((rows // 2) // sub) * sub))
        elif cols >= 2 * _LANE:
            tile_c = max(_LANE, ((cols // 2) // _LANE) * _LANE)
    return tile_r, tile_c


def _pallas_add(x2, b2, out_dtype, donate_x=False):
    """out[r, c] = x2[r, c] + b2, where b2 is (1, C) row-bias or (R, 1) per-row bias."""
    R, Cc = x2.shape
    out_itemsize = jnp.dtype(out_dtype).itemsize
    itemsize = max(x2.dtype.itemsize, out_itemsize)
    sub = _sublane(min(x2.dtype.itemsize, out_itemsize))
    tile_r, tile_c = _choose_tiles(R, Cc, itemsize, sub)
    grid = (pl.cdiv(R, tile_r), pl.cdiv(Cc, tile_c))

    if b2.shape[0] == 1:
        b_spec = pl.BlockSpec((1, tile_c), lambda i, j: (0, j))       # row bias, resident over i
    else:
        b_spec = pl.BlockSpec((tile_r, 1), lambda i, j: (i, 0))       # per-row scalar bias

    kwargs = {}
    if donate_x and x2.dtype == jnp.dtype(out_dtype):
        kwargs["input_output_aliases"] = {0: 0}   # reuse x's HBM buffer for the output

    bytes_accessed = (x2.size * x2.dtype.itemsize
                      + x2.size * out_itemsize
                      + b2.size * b2.dtype.itemsize)
    return pl.pallas_call(
        _bcast_add_kernel,
        out_shape=jax.ShapeDtypeStruct((R, Cc), out_dtype),
        grid=grid,
        in_specs=[pl.BlockSpec((tile_r, tile_c), lambda i, j: (i, j)), b_spec],
        out_specs=pl.BlockSpec((tile_r, tile_c), lambda i, j: (i, j)),
        compiler_params=pltpu.CompilerParams(
            dimension_semantics=("parallel", "parallel"),
            vmem_limit_bytes=_VMEM_LIMIT_BYTES,
        ),
        cost_estimate=pl.CostEstimate(
            flops=int(x2.size), transcendentals=0, bytes_accessed=int(bytes_accessed)),
        **kwargs,
    )(x2, b2)


def _add_bias_2d(x, bias_row, out_dtype, donate_x):
    """x: (N, C); bias_row: (C,).  Lane-density fold: pack G = 128 // gcd(C, 128)
    consecutive rows so the kernel's last dim is a multiple of 128 (unmasked stores)."""
    N, C = x.shape
    G = _LANE // math.gcd(C, _LANE)
    fold = G > 1 and N >= G and (N % G == 0 or N >= 4 * G)
    if fold:
        n_pad = -(-N // G) * G
        xs = x if n_pad == N else jnp.pad(x, ((0, n_pad - N), (0, 0)))
        xr = xs.reshape(n_pad // G, C * G)                            # free contiguous reshape
        br = jnp.tile(bias_row, G).reshape(1, C * G).astype(out_dtype)
        out = _pallas_add(xr, br, out_dtype, donate_x=donate_x).reshape(n_pad, C)
        return out if n_pad == N else out[:N]
    # Fallback (C already a multiple of 128, or too few rows to fold).
    b2 = bias_row.reshape(1, C).astype(out_dtype)
    return _pallas_add(x, b2, out_dtype, donate_x=donate_x)


def _add_bias_4d(x, bias_flat, out_dtype, donate_x):
    N, C, H, W = x.shape
    HW = H * W
    if HW % _LANE == 0:
        # Lanes carry the already-128-aligned spatial dim; rows are (batch, channel)
        # pairs with one scalar bias per row -> many row blocks to pipeline / shard.
        R = N * C
        xr = x.reshape(R, HW)
        b_rows = jnp.tile(bias_flat, N).reshape(R, 1).astype(out_dtype)
        out = _pallas_add(xr, b_rows, out_dtype, donate_x=donate_x)
        return out.reshape(N, C, H, W)
    # Odd spatial sizes (49, 81, 400, ...): fold channel+spatial into the lane axis and
    # reuse the 2-D path (which re-folds batch rows if C*HW is still not 128-aligned),
    # instead of padding every HW-lane row to 128 lanes and masking every store.
    bias_row = jnp.repeat(bias_flat, HW)                              # (C*HW,)
    out = _add_bias_2d(x.reshape(N, C * HW), bias_row, out_dtype, donate_x)
    return out.reshape(N, C, H, W)


def add_bias(x, bias_param, *, min_pallas_bytes=_MIN_PALLAS_BYTES, donate_x=False):
    """bias_param has shape (C, 1), matching nn.Parameter(bias.unsqueeze(1))."""
    bias_flat = bias_param.reshape(-1)
    out_dtype = jnp.promote_types(x.dtype, bias_flat.dtype)   # PyTorch type-promotion semantics
    if x.ndim not in (2, 4):
        raise ValueError(f"AddBias expects 2-D or 4-D input, got ndim={x.ndim}")
    # Tiny tensors (the common PPO (batch, num_actions) case): a standalone kernel's
    # launch + pipeline prologue dominates; let XLA fuse the add instead.
    if x.size * jnp.dtype(out_dtype).itemsize < min_pallas_bytes:
        b = bias_flat.astype(out_dtype)
        shape = (1, -1) if x.ndim == 2 else (1, -1, 1, 1)
        return x.astype(out_dtype) + b.reshape(shape)
    if x.ndim == 2:
        return _add_bias_2d(x, bias_flat, out_dtype, donate_x)
    return _add_bias_4d(x, bias_flat, out_dtype, donate_x)


if __name__ == "__main__":
    key = jax.random.PRNGKey(0)
    k_b, k_b48, k1, k2, k3, k4, k5, k6, k7 = jax.random.split(key, 9)

    C = 4
    bias = jax.random.normal(k_b, (C,), dtype=jnp.float32)
    bias_param = bias.reshape(C, 1)               # nn.Parameter(bias.unsqueeze(1))
    C48 = 48
    bias48 = jax.random.normal(k_b48, (C48,), dtype=jnp.float32)
    bias48_param = bias48.reshape(C48, 1)

    # 4-D, HW multiple of 128 (row-bias path). Force Pallas (tiny input would bypass).
    x4 = jax.random.normal(k1, (2, C, 16, 16), dtype=jnp.float32)
    out4 = add_bias(x4, bias_param, min_pallas_bytes=0)
    ref4 = x4 + bias.reshape(1, C, 1, 1)

    # 4-D, small odd HW (49 lanes) -> folded into lane axis via the 2-D path.
    x4b = jax.random.normal(k2, (2, C, 7, 7), dtype=jnp.float32)
    out4b = add_bias(x4b, bias_param, min_pallas_bytes=0)
    ref4b = x4b + bias.reshape(1, C, 1, 1)

    # 4-D, odd HW but enough batch rows to lane-fold (C*HW=196 -> G=32, N=64).
    x4c = jax.random.normal(k3, (64, C, 7, 7), dtype=jnp.float32)
    out4c = add_bias(x4c, bias_param, min_pallas_bytes=0)
    ref4c = x4c + bias.reshape(1, C, 1, 1)

    # 2-D tiny batch: default dispatch hits the XLA-fused bypass; also force Pallas.
    x2a = jax.random.normal(k4, (2, C), dtype=jnp.float32)
    out2a_bypass = add_bias(x2a, bias_param)
    out2a_forced = add_bias(x2a, bias_param, min_pallas_bytes=0)
    ref2a = x2a + bias.reshape(1, C)

    # 2-D, batch divisible by G=32 (lane-folded, no padding).
    x2b = jax.random.normal(k5, (256, C), dtype=jnp.float32)
    out2b = add_bias(x2b, bias_param, min_pallas_bytes=0)
    ref2b = x2b + bias.reshape(1, C)

    # 2-D, bf16 x + f32 bias, C=48 (generalized gcd fold, padded ragged batch,
    # ragged row block, dtype promotion to f32).
    x2c = jax.random.normal(k6, (522, C48), dtype=jnp.bfloat16)
    out2c = add_bias(x2c, bias48_param, min_pallas_bytes=0)
    ref2c = x2c.astype(jnp.float32) + bias48.reshape(1, C48)

    # 2-D, large enough (1.5 MiB) for the default dispatch to pick the Pallas path.
    x2d = jax.random.normal(k7, (2048, 192), dtype=jnp.float32)
    out2d = add_bias(x2d, bias48_param.reshape(-1)[:192].reshape(192, 1) * 0 + 1.0) \
        if False else add_bias(x2d, jnp.tile(bias, 48).reshape(192, 1))
    ref2d = x2d + jnp.tile(bias, 48).reshape(1, 192)

    jax.block_until_ready((out4, out4b, out4c, out2a_bypass, out2a_forced,
                           out2b, out2c, out2d))

    assert out4.shape == x4.shape and out4.dtype == jnp.float32
    assert out4b.shape == x4b.shape and out4c.shape == x4c.shape
    assert out2a_bypass.shape == x2a.shape and out2a_forced.shape == x2a.shape
    assert out2b.shape == x2b.shape
    assert out2c.shape == x2c.shape and out2c.dtype == jnp.float32
    assert out2d.shape == x2d.shape and out2d.dtype == jnp.float32

    assert jnp.allclose(out4, ref4, atol=1e-5), "4-D AddBias (HW%128==0) mismatch"
    assert jnp.allclose(out4b, ref4b, atol=1e-5), "4-D AddBias (odd HW, no fold) mismatch"
    assert jnp.allclose(out4c, ref4c, atol=1e-5), "4-D AddBias (odd HW, folded) mismatch"
    assert jnp.allclose(out2a_bypass, ref2a, atol=1e-5), "2-D AddBias (bypass) mismatch"
    assert jnp.allclose(out2a_forced, ref2a, atol=1e-5), "2-D AddBias (forced, unfolded) mismatch"
    assert jnp.allclose(out2b, ref2b, atol=1e-5), "2-D AddBias (lane-folded) mismatch"
    assert jnp.allclose(out2c, ref2c, atol=1e-5), "2-D AddBias (bf16, padded fold) mismatch"
    assert jnp.allclose(out2d, ref2d, atol=1e-5), "2-D AddBias (default dispatch) mismatch"

    print("KERNEL_OK")
</pallas_src>

<mosaic_0001>
module attributes {stable_mosaic.version = 11 : i64} {
  func.func @_bcast_add_kernel(%arg0: i32, %arg1: i32, %arg2: memref<8x128xf32, #tpu.memory_space<vmem>>, %arg3: memref<8x1xf32, #tpu.memory_space<vmem>>, %arg4: memref<8x128xf32, #tpu.memory_space<vmem>>) attributes {dimension_semantics = [#tpu.dimension_semantics<parallel>, #tpu.dimension_semantics<parallel>], iteration_bounds = array<i64: 1, 2>, scalar_prefetch = 0 : i64, scratch_operands = 0 : i64, tpu.core_type = #tpu.core_type<tc>, window_params = [{transform_indices = @transform_0, window_bounds = array<i64: 8, 128>}, {transform_indices = @transform_1, window_bounds = array<i64: 8, 1>}, {transform_indices = @transform_2, window_bounds = array<i64: 8, 128>}]} {
    %c0 = arith.constant 0 : index
    %c0_0 = arith.constant 0 : index
    %0 = vector.load %arg2[%c0, %c0_0] : memref<8x128xf32, #tpu.memory_space<vmem>>, vector<8x128xf32>
    %c0_1 = arith.constant 0 : index
    %c0_2 = arith.constant 0 : index
    %1 = vector.load %arg3[%c0_1, %c0_2] : memref<8x1xf32, #tpu.memory_space<vmem>>, vector<8x1xf32>
    %2 = vector.broadcast %1 : vector<8x1xf32> to vector<8x128xf32>
    %3 = arith.addf %0, %2 : vector<8x128xf32>
    %c0_3 = arith.constant 0 : index
    %c0_4 = arith.constant 0 : index
    %4 = vector.load %arg4[%c0_3, %c0_4] : memref<8x128xf32, #tpu.memory_space<vmem>>, vector<8x128xf32>
    tpu.vector_store %arg4[%c0_3, %c0_4], %3 {strides = array<i32>} : memref<8x128xf32, #tpu.memory_space<vmem>>, vector<8x128xf32>,
    return
  }
  func.func @transform_0(%arg0: i32, %arg1: i32) -> (i32, i32) {
    %c0_i32 = arith.constant 0 : i32
    return %arg0, %arg1 : i32, i32
  }
  func.func @transform_1(%arg0: i32, %arg1: i32) -> (i32, i32) {
    %c0_i32 = arith.constant 0 : i32
    %c0_i32_0 = arith.constant 0 : i32
    return %arg0, %c0_i32 : i32, i32
  }
  func.func @transform_2(%arg0: i32, %arg1: i32) -> (i32, i32) {
    %c0_i32 = arith.constant 0 : i32
    return %arg0, %arg1 : i32, i32
  }
}

</mosaic_0001>

<llo_original>
// kernel: tpu_custom_call.1
$region0: #{tpu_custom_call.1}
  #allocation0 [shape = 'u32[]', space=smem, size = 0x4, offset = 0x4, fixed_abs, tag = 'smem constant byte address 0x4 - core index']
  #allocation1 [shape = 'u32[144,128]{1,0:T(1,128)}', space=vmem, size = 0x12000, scoped, tag = 'internal scratch']
  %s0 = inlined_call_operand.hbm [shape: f32[8,256], index: 0, kind: input, shape index: {}]
  %s1 = inlined_call_operand.vmem [shape: f32[8,1], index: 1, kind: input, shape index: {}]
  %s2 = inlined_call_operand.hbm [shape: f32[8,256], index: 2, kind: output, shape index: {}]
  %s3 = sld [smem:[#allocation0]]
  $region45: #{tpu_custom_call.1} parent=0
    _
  %s5 = ssub.s32 1, %s3
  %s6 = scalar_select 0, %s5, %s3
  $region1: #{tpu_custom_call.1} parent=0
    #allocation2 [shape = 'u8[8192]{0}', space=vmem, size = 0x2000, scoped, tag = 'input window, operand 0']
    #allocation3 [shape = 's32[2]{0}', space=sflag, size = 0x8, scoped, tag = 'scoped memory for tpu_custom_call.1']
    #allocation4 [shape = 's32[2]{0}', space=sflag, size = 0x8, scoped, tag = 'scoped memory for tpu_custom_call.1']
    #allocation5 [shape = 'u8[8192]{0}', space=vmem, size = 0x2000, scoped, tag = 'output window, operand 0']
    %7 = vsyncpa [#allocation3], 0
    %s8 = scalar_lea.sflag [#allocation3], 1
    %9 = vsyncpa %s8, 0
    %10 = vsyncpa [#allocation4], 0
    %s11 = scalar_lea.sflag [#allocation4], 1
    %12 = vsyncpa %s11, 0
    loop: start=0, step=1, limit=4
    $region2: #{tpu_custom_call.1} parent=1 // loop_pre_header
      _
    $region3: #{tpu_custom_call.1} parent=1 // loop_header
      %s14 = sphi 0, %s18
      %p15 = scmp.ge.s32.totalorder %s14, 4
      %s21 = sphi 0, %s33
      %s22 = sphi 0, %s29
      %s23 = sphi 0, %s21
      %s24 = sphi 0, %s22
      %s25 = sphi 0, %s23
      %s26 = sphi 0, %s24
      %s38 = sphi 0, %s40
      %s41 = sphi 0, %s38
      %s42 = sphi 0, %s41
      %s58 = sphi 0, %s42
      %s64 = sphi 0, %s66
      %s67 = sphi 0, %s64
      %s68 = sphi 0, %s67
      %s84 = sphi 0, %s68
      %s92 = sphi 0, %s94
      %s95 = sphi 0, %s92
      %s96 = sphi 0, %s95
      %s112 = sphi 0, %s96
    $region4: #{tpu_custom_call.1} parent=1 // loop_header_branch
      %17 = sbr.rel (%p15) target = $region8
    $region5: #{tpu_custom_call.1} parent=1 // loop_body
      %s19 = ssub.s32 %s14, 1
      %s20 = ssub.s32 %s14, 2
      %s27 = sadd.s32 1, %s22
      %p28 = scmp.ge.s32.totalorder %s27, 2
      %s29 = scalar_select %p28, 0, %s27
      %s30 = sadd.s32 1, %s21
      %s31 = scalar_select %p28, %s30, %s21
      %p32 = scmp.ge.s32.totalorder %s31, 1
      %s33 = scalar_select %p32, 0, %s31
      %s34 = ssub.s32 %s21, %s33
      %s35 = ssub.s32 %s22, %s29
      %s36 = sor.u32 %s34, %s35
      %p37 = scmp.eq.s32.totalorder %s36, 0
      %s39 = sadd.s32 %s38, 1
      %s40 = scalar_select %p37, %s38, %s39
      %p43 = pneg %p37
      %p44 = scmp.eq.s32.totalorder %s14, 1
      %p45 = por %p43, %p44
      %p46 = scmp.ne.s32.totalorder %s38, %s41
      %p47 = scmp.eq.s32.totalorder %s14, 0
      %p48 = por %p46, %p47
      %p49 = scmp.ne.s32.totalorder %s38, %s41
      %p50 = scmp.eq.s32.totalorder %s19, 1
      %p51 = por %p49, %p50
      %p52 = scmp.ne.s32.totalorder %s41, %s42
      %p53 = scmp.eq.s32.totalorder %s19, 0
      %p54 = por %p52, %p53
      %p55 = scmp.ne.s32.totalorder %s41, %s42
      %p56 = scmp.eq.s32.totalorder %s20, 1
      %p57 = por %p55, %p56
      %p59 = scmp.ne.s32.totalorder %s42, %s58
      %p60 = scmp.eq.s32.totalorder %s20, 0
      %p61 = por %p59, %p60
      %s62 = ssub.s32 %s21, %s33
      %p63 = scmp.eq.s32.totalorder %s62, 0
      %s65 = sadd.s32 %s64, 1
      %s66 = scalar_select %p63, %s64, %s65
      %p69 = pneg %p63
      %p70 = scmp.eq.s32.totalorder %s14, 1
      %p71 = por %p69, %p70
      %p72 = scmp.ne.s32.totalorder %s64, %s67
      %p73 = scmp.eq.s32.totalorder %s14, 0
      %p74 = por %p72, %p73
      %p75 = scmp.ne.s32.totalorder %s64, %s67
      %p76 = scmp.eq.s32.totalorder %s19, 1
      %p77 = por %p75, %p76
      %p78 = scmp.ne.s32.totalorder %s67, %s68
      %p79 = scmp.eq.s32.totalorder %s19, 0
      %p80 = por %p78, %p79
      %p81 = scmp.ne.s32.totalorder %s67, %s68
      %p82 = scmp.eq.s32.totalorder %s20, 1
      %p83 = por %p81, %p82
      %p85 = scmp.ne.s32.totalorder %s68, %s84
      %p86 = scmp.eq.s32.totalorder %s20, 0
      %p87 = por %p85, %p86
      %s88 = ssub.s32 %s21, %s33
      %s89 = ssub.s32 %s22, %s29
      %s90 = sor.u32 %s88, %s89
      %p91 = scmp.eq.s32.totalorder %s90, 0
      %s93 = sadd.s32 %s92, 1
      %s94 = scalar_select %p91, %s92, %s93
      %p97 = pneg %p91
      %p98 = scmp.eq.s32.totalorder %s14, 1
      %p99 = por %p97, %p98
      %p100 = scmp.ne.s32.totalorder %s92, %s95
      %p101 = scmp.eq.s32.totalorder %s14, 0
      %p102 = por %p100, %p101
      %p103 = scmp.ne.s32.totalorder %s92, %s95
      %p104 = scmp.eq.s32.totalorder %s19, 1
      %p105 = por %p103, %p104
      %p106 = scmp.ne.s32.totalorder %s95, %s96
      %p107 = scmp.eq.s32.totalorder %s19, 0
      %p108 = por %p106, %p107
      %p109 = scmp.ne.s32.totalorder %s95, %s96
      %p110 = scmp.eq.s32.totalorder %s20, 1
      %p111 = por %p109, %p110
      %p113 = scmp.ne.s32.totalorder %s96, %s112
      %p114 = scmp.eq.s32.totalorder %s20, 0
      %p115 = por %p113, %p114
      %p116 = scmp.le.s32.totalorder 1, %s14
      %p117 = scmp.lt.s32.totalorder %s14, 3
      %p118 = pnand %p116, %p117
      %p119 = pneg %p118
      // Predicated region
      $region9: #{tpu_custom_call.1} parent=5 // pred_check
        _
      $region10: #{tpu_custom_call.1} parent=5 // pred_check_branch
        %121 = sbr.rel (%p118) target = $region12
      $region11: #{tpu_custom_call.1} parent=5 // pred_region
        %s122 = ssub.s32 %s14, 1
        // Predicated region
        $region13: #{tpu_custom_call.1} parent=11 // pred_check
          %p123 = pneg %p80
        $region14: #{tpu_custom_call.1} parent=11 // pred_check_branch
          %125 = sbr.rel (%p123) target = $region16
        $region15: #{tpu_custom_call.1} parent=11 // pred_region
          %p126 = scmp.lt.s32.totalorder %s23, 0
          %s127 = scalar_select %p126, %s23, 0
          %s128 = smul.addr %s127, 8
          %s129 = scalar_lea.vmem %s1, %s128
        $region16: #{tpu_custom_call.1} parent=11 // pred_fallthru
          _
      $region12: #{tpu_custom_call.1} parent=5 // pred_fallthru
        _
      %p130 = scmp.lt.s32.totalorder %s14, 2
      // Predicated region
      $region17: #{tpu_custom_call.1} parent=5 // pred_check
        %p131 = pneg %p130
      $region18: #{tpu_custom_call.1} parent=5 // pred_check_branch
        %133 = sbr.rel (%p131) target = $region20
      $region19: #{tpu_custom_call.1} parent=5 // pred_region
        // Predicated region
        $region21: #{tpu_custom_call.1} parent=19 // pred_check
          %p134 = pneg %p48
        $region22: #{tpu_custom_call.1} parent=19 // pred_check_branch
          %136 = sbr.rel (%p134) target = $region24
        $region23: #{tpu_custom_call.1} parent=19 // pred_region
          %s137 = sand.u32 %s38, 1
          %s138 = scalar_lea.sflag [#allocation3], %s137
          %s139 = sand.u32 %s38, 1
          %s140 = smul.addr %s139, 8
          %s141 = scalar_lea.vmem [#allocation2], %s140
          %s143 = ssub.s32 128, 128
          %144 = vsyncadd %s138, %s143
          %s145 = smul.addr %s21, 2
          %s146 = sadd.s32 %s22, %s145
          %s147 = smul.addr %s146, 128
          %s148 = scalar_lea.hbm %s0, %s147
          %s150 = sshll.u32 %s141, 4
          %s151 = int_to_ptr.vmem [resolvable:$true] %s150
          %153 = dma.hbm_to_vmem [thread:$0]  %s148, 128, %s151, %s138
        $region24: #{tpu_custom_call.1} parent=19 // pred_fallthru
          _
      $region20: #{tpu_custom_call.1} parent=5 // pred_fallthru
        _
      %p154 = scmp.le.s32.totalorder 1, %s14
      %p155 = scmp.lt.s32.totalorder %s14, 3
      %p156 = pnand %p154, %p155
      %p157 = pneg %p156
      // Predicated region
      $region25: #{tpu_custom_call.1} parent=5 // pred_check
        _
      $region26: #{tpu_custom_call.1} parent=5 // pred_check_branch
        %159 = sbr.rel (%p156) target = $region28
      $region27: #{tpu_custom_call.1} parent=5 // pred_region
        %s160 = ssub.s32 %s14, 1
        %s161 = sand.u32 %s41, 1
        %s162 = scalar_lea.sflag [#allocation3], %s161
        %s163 = sand.u32 %s41, 1
        %s164 = smul.addr %s163, 8
        %s165 = scalar_lea.vmem [#allocation2], %s164
        // Predicated region
        $region29: #{tpu_custom_call.1} parent=27 // pred_check
          %p166 = pneg %p54
        $region30: #{tpu_custom_call.1} parent=27 // pred_check_branch
          %168 = sbr.rel (%p166) target = $region32
        $region31: #{tpu_custom_call.1} parent=27 // pred_region
          %169 = dma.done %s162, 128
        $region32: #{tpu_custom_call.1} parent=27 // pred_fallthru
          _
        %s170 = sand.u32 %s41, 1
        %s171 = scalar_lea.sflag [#allocation3], %s170
        %s172 = sand.u32 %s41, 1
        %s173 = smul.addr %s172, 8
        %s174 = scalar_lea.vmem [#allocation2], %s173
        %p175 = pneg %p54
        %p176 = pneg %p51
        %p177 = scmp.lt.s32.totalorder %s23, 0
        %s178 = scalar_select %p177, %s23, 0
        %s179 = smul.addr %s178, 8
        %s180 = scalar_lea.vmem %s1, %s179
        %p181 = pneg %p80
        %p182 = pneg %p77
        %p183 = pneg %p108
        %p184 = pneg %p105
        %s185 = sand.u32 %s95, 1
        %s186 = scalar_lea.sflag [#allocation4], %s185
        %s187 = sand.u32 %s95, 1
        %s188 = smul.addr %s187, 8
        %s189 = scalar_lea.vmem [#allocation5], %s188
        %p190 = scmp.lt.s32.totalorder %s23, 0
        %s191 = scalar_select %p190, %s23, 0
        %s192 = smul.addr %s191, 8
        %s193 = scalar_lea.vmem %s1, %s192
        %v194 = vld [vmem:[%s165] sm:$0xff]
        %v195 = vld [vmem:[%s193] sm:$0xff]
        %197 = vset.pattern.permute.xlu0 0
        %198 = vperm.xlu0 %197, %v195
        %v199 = vpop.permute.xlu0 %198
        %v201 = vadd.f32 %v194, %v199
        %202 = vst [vmem:[%s189] sm:$0xff] %v201
        %s203 = sand.u32 %s95, 1
        %s204 = scalar_lea.sflag [#allocation4], %s203
        %s205 = sand.u32 %s95, 1
        %s206 = smul.addr %s205, 8
        %s207 = scalar_lea.vmem [#allocation5], %s206
        // Predicated region
        $region33: #{tpu_custom_call.1} parent=27 // pred_check
          %p208 = pneg %p105
        $region34: #{tpu_custom_call.1} parent=27 // pred_check_branch
          %210 = sbr.rel (%p208) target = $region36
        $region35: #{tpu_custom_call.1} parent=27 // pred_region
          %s212 = ssub.s32 128, 128
          %213 = vsyncadd %s204, %s212
          %s214 = smul.addr %s23, 2
          %s215 = sadd.s32 %s24, %s214
          %s216 = smul.addr %s215, 128
          %s217 = scalar_lea.hbm %s2, %s216
          %s219 = sshll.u32 %s207, 4
          %s220 = int_to_ptr.vmem [resolvable:$true] %s219
          %222 = dma.vmem_to_hbm [thread:$0]  %s220, 128, %s217, %s204
        $region36: #{tpu_custom_call.1} parent=27 // pred_fallthru
          _
      $region28: #{tpu_custom_call.1} parent=5 // pred_fallthru
        _
      %p223 = scmp.le.s32.totalorder 2, %s14
      // Predicated region
      $region37: #{tpu_custom_call.1} parent=5 // pred_check
        %p224 = pneg %p223
      $region38: #{tpu_custom_call.1} parent=5 // pred_check_branch
        %226 = sbr.rel (%p224) target = $region40
      $region39: #{tpu_custom_call.1} parent=5 // pred_region
        %s227 = ssub.s32 %s14, 2
        // Predicated region
        $region41: #{tpu_custom_call.1} parent=39 // pred_check
          %p228 = pneg %p111
        $region42: #{tpu_custom_call.1} parent=39 // pred_check_branch
          %230 = sbr.rel (%p228) target = $region44
        $region43: #{tpu_custom_call.1} parent=39 // pred_region
          %s231 = sand.u32 %s96, 1
          %s232 = scalar_lea.sflag [#allocation4], %s231
          %s233 = sand.u32 %s96, 1
          %s234 = smul.addr %s233, 8
          %s235 = scalar_lea.vmem [#allocation5], %s234
          %236 = dma.done %s232, 128
        $region44: #{tpu_custom_call.1} parent=39 // pred_fallthru
          _
      $region40: #{tpu_custom_call.1} parent=5 // pred_fallthru
        _
    $region6: #{tpu_custom_call.1} parent=1 // loop_footer
      %s18 = sadd.s32 1, %s14
    $region7: #{tpu_custom_call.1} parent=1 // loop_footer_branch
      %13 = sbr.rel target = $region3
    $region8: #{tpu_custom_call.1} parent=1 // loop_exit
      _
    %237 = vsyncpa [#allocation3], 1
    %s238 = scalar_lea.sflag [#allocation3], 1
    %239 = vsyncpa %s238, 1
    %240 = vsyncpa [#allocation4], 1
    %s241 = scalar_lea.sflag [#allocation4], 1
    %242 = vsyncpa %s241, 1

</llo_original>
